<compile_context>
chip_gen: v6e
topology: v6e:2x2x1
jax: 0.10.0
libtpu: 0.0.40
codegen_flags: <defaults>
</compile_context>

<pallas_src>
import functools

import jax
import jax.numpy as jnp
from jax.experimental import pallas as pl
from jax.experimental.pallas import tpu as pltpu


def _round_up(n, m):
    return ((n + m - 1) // m) * m


def _cdiv(a, b):
    return (a + b - 1) // b


def fc_reg_kernel(x_ref, w_ref, b_ref, o_ref, *, reg_dim):
    # Folded affine map of the 3 activation-free Linear layers:
    #   y = x @ (W1^T W2^T W3^T) + ((b1 W2^T + b2) W3^T + b3)
    # Single MXU pass with f32 accumulation; f32 bias add on the VPU.
    acc = jnp.dot(x_ref[...], w_ref[...], preferred_element_type=jnp.float32)
    acc = acc + b_ref[...]
    # Store only the real reg_dim lanes (narrow store -> 16x less HBM
    # writeback than padding the output row to 128 lanes).
    o_ref[...] = acc[:, :reg_dim].astype(o_ref.dtype)


def prepare_params(params, compute_dtype=jnp.float32):
    """One-time prep (at load time, not per step): fold the three bias-only
    Linear layers into a single affine map and pad only its output lane dim
    to a multiple of 128. Folding is exact algebra (no activations); it is
    done in f32 and only the folded weight is cast to compute_dtype (bias,
    accumulation and epilogue stay f32)."""
    w1, w2, w3 = (params[k].astype(jnp.float32) for k in ("w1", "w2", "w3"))
    b1, b2, b3 = (params[k].astype(jnp.float32) for k in ("b1", "b2", "b3"))
    F = w1.shape[1]
    R = w3.shape[0]
    Rp = _round_up(R, 128)

    wc = w1.T @ w2.T @ w3.T                   # [F, R]
    bc = (b1 @ w2.T + b2) @ w3.T + b3         # [R]

    wc_p = jnp.zeros((F, Rp), jnp.float32).at[:, :R].set(wc).astype(compute_dtype)
    bc_p = jnp.zeros((1, Rp), jnp.float32).at[0, :R].set(bc)

    dims = dict(F=F, R=R, Rp=Rp)
    return (wc_p, bc_p), dims


_TB_MAX = 4096  # rows per grid step (f32 x tile at F=16 -> 256 KiB: fits all gens)


def _vmem_cap_bytes():
    # Device-aware VMEM budget (v5e/v6e: 128 MiB/core, v7x: 64 MiB per TC).
    try:
        return int(pltpu.get_tpu_info().vmem_capacity_bytes)
    except Exception:
        return 64 * 1024 * 1024  # conservative fallback (v7x per-TC VMEM)


def fc_reg_forward(x, packed, dims, compute_dtype=jnp.float32):
    """x: [B, feature_dim]. packed/dims: from prepare_params. Returns [B, reg_dim] f32."""
    wc_p, bc_p = packed
    F, R, Rp = dims["F"], dims["R"], dims["Rp"]
    B = x.shape[0]
    assert x.shape[1] == F

    # ---- batch tiling ------------------------------------------------------
    # Large row tiles amortize the ~0.35us/step grid overhead (this kernel is
    # DMA / step-overhead bound). Keep >=2 grid steps when the batch is big
    # enough so the "parallel" axis has work for both v7x TensorCores, and
    # round tiles to 8 sublanes while keeping row-padding waste small.
    B8 = _round_up(B, 8)
    n_tiles = _cdiv(B8, _TB_MAX)
    if B8 >= 16:
        n_tiles = max(n_tiles, 2)
    TB = _round_up(_cdiv(B8, n_tiles), 8)
    Bp = n_tiles * TB

    # No lane padding of x (F stays the true feature width); pad rows only.
    xp = x.astype(compute_dtype)
    if Bp != B:
        xp = jnp.pad(xp, ((0, Bp - B), (0, 0)))

    grid = (n_tiles,)
    resident = lambda i: (0, 0)  # folded weight/bias: same block every step
    in_specs = [
        pl.BlockSpec((TB, F), lambda i: (i, 0)),   # x tile, pipelined
        pl.BlockSpec((F, Rp), resident),           # folded weight (VMEM-resident)
        pl.BlockSpec((1, Rp), resident),           # folded bias
        # NOTE: pipeline_mode=pl.Buffered(1) on the resident specs would halve
        # their buffering, but after folding they total <20 KiB, so skipped.
    ]
    out_specs = pl.BlockSpec((TB, R), lambda i: (i, 0))

    w_isz = jnp.dtype(compute_dtype).itemsize
    # True (unpadded, folded) cost for XLA's scheduler.
    cost = pl.CostEstimate(
        flops=2 * B * F * R + B * R,
        transcendentals=0,
        bytes_accessed=B * F * w_isz + B * R * 4 + F * R * w_isz + R * 4,
    )

    # Double-buffered x/out tiles + (double-buffered) resident weight/bias +
    # the (TB, Rp) f32 matmul result, with 2x headroom, clamped to the device.
    vmem_needed = (
        2 * TB * (F * w_isz + R * 4)
        + 2 * (F * Rp * w_isz + Rp * 4)
        + TB * Rp * 4
    )
    vmem_limit = int(
        min(_vmem_cap_bytes() - 16 * 1024 * 1024,
            max(8 * 1024 * 1024, 2 * vmem_needed)))

    out_p = pl.pallas_call(
        functools.partial(fc_reg_kernel, reg_dim=R),
        out_shape=jax.ShapeDtypeStruct((Bp, R), jnp.float32),
        grid=grid,
        in_specs=in_specs,
        out_specs=out_specs,
        compiler_params=pltpu.CompilerParams(
            dimension_semantics=("parallel",),   # batch axis -> both v7x TCs
            vmem_limit_bytes=vmem_limit,
        ),
        cost_estimate=cost,
    )(xp, wc_p, bc_p)

    return out_p[:B]


def init_params(key, feature_dim, hidden_dim, reg_dim):
    """Deterministic synthetic parameters, PyTorch nn.Linear shape convention."""
    ks = jax.random.split(key, 6)

    def u(k, shape, fan_in):
        bound = 1.0 / jnp.sqrt(fan_in)
        return jax.random.uniform(k, shape, jnp.float32, -bound, bound)

    return {
        "w1": u(ks[0], (hidden_dim, feature_dim), feature_dim),
        "b1": u(ks[1], (hidden_dim,), feature_dim),
        "w2": u(ks[2], (hidden_dim * 2, hidden_dim), hidden_dim),
        "b2": u(ks[3], (hidden_dim * 2,), hidden_dim),
        "w3": u(ks[4], (reg_dim, hidden_dim * 2), hidden_dim * 2),
        "b3": u(ks[5], (reg_dim,), hidden_dim * 2),
    }


if __name__ == "__main__":
    feature_dim, hidden_dim, reg_dim, batch = 16, 32, 8, 4

    key = jax.random.PRNGKey(0)
    k_x, k_p, k_x2 = jax.random.split(key, 3)
    x = jax.random.normal(k_x, (batch, feature_dim), jnp.float32)
    params = init_params(k_p, feature_dim, hidden_dim, reg_dim)

    # Pure-JAX reference: same math as the PyTorch forward (3 Linears, no act).
    def reference(xs):
        h = xs @ params["w1"].T + params["b1"]
        h = h @ params["w2"].T + params["b2"]
        return h @ params["w3"].T + params["b3"]

    ref = reference(x)

    # f32 path.
    packed_f32, dims = prepare_params(params, compute_dtype=jnp.float32)
    out = jax.block_until_ready(
        fc_reg_forward(x, packed_f32, dims, compute_dtype=jnp.float32))
    assert out.shape == (batch, reg_dim)
    assert jnp.allclose(out, ref, atol=1e-4, rtol=1e-4)

    # Larger batch: exercises row padding, >=2 grid steps (megacore) and the
    # pipelined x/out tiles.
    x2 = jax.random.normal(k_x2, (1000, feature_dim), jnp.float32)
    out2 = jax.block_until_ready(
        fc_reg_forward(x2, packed_f32, dims, compute_dtype=jnp.float32))
    assert out2.shape == (1000, reg_dim)
    assert jnp.allclose(out2, reference(x2), atol=1e-4, rtol=1e-4)

    # bf16-operand / f32-accumulate fast path (v6e / v7x); bias & epilogue f32.
    packed_bf16, dims_b = prepare_params(params, compute_dtype=jnp.bfloat16)
    out_bf16 = jax.block_until_ready(
        fc_reg_forward(x, packed_bf16, dims_b, compute_dtype=jnp.bfloat16))
    assert out_bf16.shape == (batch, reg_dim)
    assert jnp.allclose(out_bf16, ref, atol=5e-2, rtol=5e-2)

    print("KERNEL_OK")
</pallas_src>

<mosaic_0001>
module attributes {stable_mosaic.version = 11 : i64} {
  func.func @fc_reg_kernel(%arg0: i32, %arg1: memref<8x16xf32, #tpu.memory_space<vmem>>, %arg2: memref<16x128xf32, #tpu.memory_space<vmem>>, %arg3: memref<1x128xf32, #tpu.memory_space<vmem>>, %arg4: memref<8x8xf32, #tpu.memory_space<vmem>>) attributes {dimension_semantics = [#tpu.dimension_semantics<parallel>], iteration_bounds = array<i64: 1>, scalar_prefetch = 0 : i64, scratch_operands = 0 : i64, tpu.core_type = #tpu.core_type<tc>, window_params = [{transform_indices = @transform_0, window_bounds = array<i64: 8, 16>}, {pipeline_mode = #tpu.pipeline_mode<synchronous>, transform_indices = @transform_1, window_bounds = array<i64: 16, 128>}, {pipeline_mode = #tpu.pipeline_mode<synchronous>, transform_indices = @transform_2, window_bounds = array<i64: 1, 128>}, {transform_indices = @transform_3, window_bounds = array<i64: 8, 8>}]} {
    %c0 = arith.constant 0 : index
    %c0_0 = arith.constant 0 : index
    %0 = vector.load %arg1[%c0, %c0_0] : memref<8x16xf32, #tpu.memory_space<vmem>>, vector<8x16xf32>
    %c0_1 = arith.constant 0 : index
    %c0_2 = arith.constant 0 : index
    %1 = vector.load %arg2[%c0_1, %c0_2] : memref<16x128xf32, #tpu.memory_space<vmem>>, vector<16x128xf32>
    %cst = arith.constant dense<0.000000e+00> : vector<8x128xf32>
    %2 = tpu.matmul %0, %1, %cst {dimension_numbers = #tpu.dot_dimension_numbers<[1], [0], [0], [1], [0, 0, 1, 1], [], []>} : vector<8x16xf32>, vector<16x128xf32>, vector<8x128xf32> -> vector<8x128xf32>
    %c0_3 = arith.constant 0 : index
    %c0_4 = arith.constant 0 : index
    %3 = vector.load %arg3[%c0_3, %c0_4] : memref<1x128xf32, #tpu.memory_space<vmem>>, vector<1x128xf32>
    %4 = vector.broadcast %3 : vector<1x128xf32> to vector<8x128xf32>
    %5 = arith.addf %2, %4 : vector<8x128xf32>
    %6 = vector.extract_strided_slice %5 {offsets = [0, 0], sizes = [8, 8], strides = [1, 1]} : vector<8x128xf32> to vector<8x8xf32>
    %c0_5 = arith.constant 0 : index
    %c0_6 = arith.constant 0 : index
    %7 = vector.load %arg4[%c0_5, %c0_6] : memref<8x8xf32, #tpu.memory_space<vmem>>, vector<8x8xf32>
    tpu.vector_store %arg4[%c0_5, %c0_6], %6 {strides = array<i32>} : memref<8x8xf32, #tpu.memory_space<vmem>>, vector<8x8xf32>,
    return
  }
  func.func @transform_0(%arg0: i32) -> (i32, i32) {
    %c0_i32 = arith.constant 0 : i32
    %c0_i32_0 = arith.constant 0 : i32
    return %arg0, %c0_i32 : i32, i32
  }
  func.func @transform_1(%arg0: i32) -> (i32, i32) {
    %c0_i32 = arith.constant 0 : i32
    %c0_i32_0 = arith.constant 0 : i32
    %c0_i32_1 = arith.constant 0 : i32
    return %c0_i32, %c0_i32_0 : i32, i32
  }
  func.func @transform_2(%arg0: i32) -> (i32, i32) {
    %c0_i32 = arith.constant 0 : i32
    %c0_i32_0 = arith.constant 0 : i32
    %c0_i32_1 = arith.constant 0 : i32
    return %c0_i32, %c0_i32_0 : i32, i32
  }
  func.func @transform_3(%arg0: i32) -> (i32, i32) {
    %c0_i32 = arith.constant 0 : i32
    %c0_i32_0 = arith.constant 0 : i32
    return %arg0, %c0_i32 : i32, i32
  }
}

</mosaic_0001>

<llo_original>
// kernel: tpu_custom_call.1
$region0: #{tpu_custom_call.1}
  #allocation0 [shape = 'u32[]', space=smem, size = 0x4, offset = 0x4, fixed_abs, tag = 'smem constant byte address 0x4 - core index']
  #allocation1 [shape = 'u32[144,128]{1,0:T(1,128)}', space=vmem, size = 0x12000, scoped, tag = 'internal scratch']
  %s0 = inlined_call_operand.hbm [shape: f32[8,16], index: 0, kind: input, shape index: {}]
  %s1 = inlined_call_operand.hbm [shape: f32[16,128], index: 1, kind: input, shape index: {}]
  %s2 = inlined_call_operand.vmem [shape: f32[1,128], index: 2, kind: input, shape index: {}]
  %s3 = inlined_call_operand.hbm [shape: f32[8,8], index: 3, kind: output, shape index: {}]
  %s4 = sld [smem:[#allocation0]]
  $region30: #{tpu_custom_call.1} parent=0
    _
  %s6 = ssub.s32 1, %s4
  %s7 = scalar_select 0, %s6, %s4
  $region1: #{tpu_custom_call.1} parent=0
    #allocation2 [shape = 'u8[4096]{0}', space=vmem, size = 0x1000, scoped, tag = 'input window, operand 0, single buffered']
    #allocation3 [shape = 's32[1]{0}', space=sflag, size = 0x4, scoped, tag = 'scoped memory for tpu_custom_call.1']
    #allocation4 [shape = 's32[1]{0}', space=sflag, size = 0x4, scoped, tag = 'scoped memory for tpu_custom_call.1']
    #allocation5 [shape = 'u8[8192]{0}', space=vmem, size = 0x2000, scoped, tag = 'input window, operand 1, single buffered']
    #allocation6 [shape = 's32[1]{0}', space=sflag, size = 0x4, scoped, tag = 'scoped memory for tpu_custom_call.1']
    #allocation7 [shape = 'u8[4096]{0}', space=vmem, size = 0x1000, scoped, tag = 'output window, operand 0, single buffered']
    %8 = vsyncpa [#allocation3], 0
    %9 = vsyncpa [#allocation6], 0
    %10 = vsyncpa [#allocation4], 0
    // Predicated region
    $region2: #{tpu_custom_call.1} parent=1 // pred_check
      _
    $region3: #{tpu_custom_call.1} parent=1 // pred_check_branch
      %12 = sbr.rel (0) target = $region5
    $region4: #{tpu_custom_call.1} parent=1 // pred_region
      %s14 = ssub.s32 128, 128
      %15 = vsyncadd [#allocation3], %s14
      %s17 = sshll.u32 [#allocation2], 4
      %s18 = int_to_ptr.vmem [resolvable:$true] %s17
      %20 = dma.hbm_to_vmem [thread:$0]  %s0, 128, %s18, [#allocation3]
    $region5: #{tpu_custom_call.1} parent=1 // pred_fallthru
      _
    // Predicated region
    $region6: #{tpu_custom_call.1} parent=1 // pred_check
      _
    $region7: #{tpu_custom_call.1} parent=1 // pred_check_branch
      %22 = sbr.rel (0) target = $region9
    $region8: #{tpu_custom_call.1} parent=1 // pred_region
      %s24 = ssub.s32 256, 256
      %25 = vsyncadd [#allocation6], %s24
      %s26 = sshll.u32 [#allocation5], 4
      %s27 = int_to_ptr.vmem [resolvable:$true] %s26
      %32 = dma.hbm_to_vmem [thread:$0]  %s1, 256, %s27, [#allocation6], 128, 128, 8
    $region9: #{tpu_custom_call.1} parent=1 // pred_fallthru
      _
    // Predicated region
    $region10: #{tpu_custom_call.1} parent=1 // pred_check
      _
    $region11: #{tpu_custom_call.1} parent=1 // pred_check_branch
      %34 = sbr.rel (0) target = $region13
    $region12: #{tpu_custom_call.1} parent=1 // pred_region
      _
    $region13: #{tpu_custom_call.1} parent=1 // pred_fallthru
      _
    // Predicated region
    $region14: #{tpu_custom_call.1} parent=1 // pred_check
      _
    $region15: #{tpu_custom_call.1} parent=1 // pred_check_branch
      %36 = sbr.rel (0) target = $region17
    $region16: #{tpu_custom_call.1} parent=1 // pred_region
      %37 = dma.done [#allocation3], 128
    $region17: #{tpu_custom_call.1} parent=1 // pred_fallthru
      _
    // Predicated region
    $region18: #{tpu_custom_call.1} parent=1 // pred_check
      _
    $region19: #{tpu_custom_call.1} parent=1 // pred_check_branch
      %39 = sbr.rel (0) target = $region21
    $region20: #{tpu_custom_call.1} parent=1 // pred_region
      %40 = dma.done [#allocation6], 256
    $region21: #{tpu_custom_call.1} parent=1 // pred_fallthru
      _
    %v41 = vld [vmem:[#allocation2] sm:$0xff]
    %v42 = vld [vmem:[#allocation5] sm:$0xff]
    %v43 = vld [vmem:[#allocation5 + $0x8] sm:$0xff]
    %v44 = vld [vmem:[%s2] sm:$0x1]
    %v46 = vlaneseq
    %v47 = vshrl.u32 %v46, 7
    %v48 = vsub.s32 0, %v47
    %v49 = vrot.slane %v44, %v48
    %vm51 = vcmask 130048
    %v53 = vsel %vm51, %v41, 0
    %55 = vmatprep.subr.mxu0 0.0
    %56 = vmatpush1.msra.mxu0 0.0
    %57 = vmatprep.subr.mxu0 0.0
    %58 = vmatpush1.msra.mxu0 0.0
    %59 = vmatprep.subr.mxu0 0.0
    %60 = vmatpush1.msra.mxu0 0.0
    %61 = vmatprep.subr.mxu0 0.0
    %62 = vmatpush1.msra.mxu0 0.0
    %63 = vmatprep.subr.mxu0 0.0
    %64 = vmatpush1.msra.mxu0 0.0
    %65 = vmatprep.subr.mxu0 0.0
    %66 = vmatpush1.msra.mxu0 0.0
    %67 = vmatprep.subr.mxu0 0.0
    %68 = vmatpush1.msra.mxu0 0.0
    %69 = vmatprep.subr.mxu0 0.0
    %70 = vmatpush1.msra.mxu0 0.0
    %71 = vmatprep.subr.mxu0 0.0
    %72 = vmatpush1.msra.mxu0 0.0
    %73 = vmatprep.subr.mxu0 0.0
    %74 = vmatpush1.msra.mxu0 0.0
    %75 = vmatprep.subr.mxu0 0.0
    %76 = vmatpush1.msra.mxu0 0.0
    %77 = vmatprep.subr.mxu0 0.0
    %78 = vmatpush1.msra.mxu0 0.0
    %79 = vmatprep.subr.mxu0 0.0
    %80 = vmatpush1.msra.mxu0 0.0
    %81 = vmatprep.subr.mxu0 0.0
    %82 = vmatpush1.msra.mxu0 0.0
    %83 = vmatprep.subr.mxu0 0.0
    %84 = vmatpush1.msra.mxu0 %v43
    %85 = vmatprep.subr.mxu0 0.0
    %86 = vmatpush1.msra.mxu0 %v42
    %87 = vmatprep.subr.mxu0 0.0
    %88 = vmatpush2.msra.mxu0 0.0
    %89 = vmatprep.subr.mxu0 0.0
    %90 = vmatpush2.msra.mxu0 0.0
    %91 = vmatprep.subr.mxu0 0.0
    %92 = vmatpush2.msra.mxu0 0.0
    %93 = vmatprep.subr.mxu0 0.0
    %94 = vmatpush2.msra.mxu0 0.0
    %95 = vmatprep.subr.mxu0 0.0
    %96 = vmatpush2.msra.mxu0 0.0
    %97 = vmatprep.subr.mxu0 0.0
    %98 = vmatpush2.msra.mxu0 0.0
    %99 = vmatprep.subr.mxu0 0.0
    %100 = vmatpush2.msra.mxu0 0.0
    %101 = vmatprep.subr.mxu0 0.0
    %102 = vmatpush2.msra.mxu0 0.0
    %103 = vmatprep.subr.mxu0 0.0
    %104 = vmatpush2.msra.mxu0 0.0
    %105 = vmatprep.subr.mxu0 0.0
    %106 = vmatpush2.msra.mxu0 0.0
    %107 = vmatprep.subr.mxu0 0.0
    %108 = vmatpush2.msra.mxu0 0.0
    %109 = vmatprep.subr.mxu0 0.0
    %110 = vmatpush2.msra.mxu0 0.0
    %111 = vmatprep.subr.mxu0 0.0
    %112 = vmatpush2.msra.mxu0 0.0
    %113 = vmatprep.subr.mxu0 0.0
    %114 = vmatpush2.msra.mxu0 0.0
    %115 = vmatprep.subr.mxu0 0.0
    %116 = vmatpush2.msra.mxu0 0.0
    %117 = vmatprep.subr.mxu0 0.0
    %118 = vmatpush2.msra.mxu0 0.0
    %119 = vmatprep.mubr.f32.mxu0 0.0
    %120 = vmatmul.mubr.f32.gmra.mxu0 %v53
    %v121 = vpop.f32.mrf.mxu0
    %v122 = vadd.f32 %v49, %v121
    %v123 = vpop.f32.mrf.mxu0
    %124 = vdwg.mxu0
    %vm125 = vcmask 64512
    %126 = vst.msk [vmem:[#allocation7] sm:$0xff] %vm125, %v122
    // Predicated region
    $region22: #{tpu_custom_call.1} parent=1 // pred_check
      _
    $region23: #{tpu_custom_call.1} parent=1 // pred_check_branch
      %128 = sbr.rel (0) target = $region25
    $region24: #{tpu_custom_call.1} parent=1 // pred_region
      %s130 = ssub.s32 128, 128
      %131 = vsyncadd [#allocation4], %s130
      %s133 = sshll.u32 [#allocation7], 4
      %s134 = int_to_ptr.vmem [resolvable:$true] %s133
      %136 = dma.vmem_to_hbm [thread:$0]  %s134, 128, %s3, [#allocation4]
    $region25: #{tpu_custom_call.1} parent=1 // pred_fallthru
      _
    // Predicated region
    $region26: #{tpu_custom_call.1} parent=1 // pred_check
      _
    $region27: #{tpu_custom_call.1} parent=1 // pred_check_branch
      %138 = sbr.rel (0) target = $region29
    $region28: #{tpu_custom_call.1} parent=1 // pred_region
      %139 = dma.done [#allocation4], 128
    $region29: #{tpu_custom_call.1} parent=1 // pred_fallthru
      _
    %140 = vsyncpa [#allocation3], 1
    %141 = vsyncpa [#allocation6], 1
    %142 = vsyncpa [#allocation4], 1

</llo_original>
